<compile_context>
chip_gen: v5e
topology: v5e:2x2
jax: 0.10.0
libtpu: 0.0.40
codegen_flags: <defaults>
</compile_context>

<pallas_src>
import functools

import jax
import jax.numpy as jnp
from jax import lax
from jax.experimental import pallas as pl
from jax.experimental.pallas import tpu as pltpu


def _round_up(x, m):
    return ((x + m - 1) // m) * m


def _class_encoding_kernel(idx_ref, table_ref, out_ref):
    # idx_ref:   (TB, PK)        int32 -- PK consecutive positions per output row
    # table_ref: (PK*E, PK*E)    f32   -- block-diagonal kron(I_PK, table)
    # out_ref:   (TB, PK*E)      f32   -- lane-dense gathered embeddings
    tb, pk = idx_ref.shape
    lane = out_ref.shape[1]
    e = lane // pk

    idx = idx_ref[...]
    # Out-of-range / negative ids map to a sentinel that never matches any
    # column -> zero output rows (original module asserts this never happens).
    idx = jnp.where((idx >= 0) & (idx < e), idx, lane)

    col = lax.broadcasted_iota(jnp.int32, (tb, lane), 1)
    # One-hot over the packed 128-lane axis: row r, lane p*E + i is hot iff
    # idx[r, p] == i.  The PK class ranges are disjoint, so OR is exact.
    match = col == idx[:, 0:1]
    for p in range(1, pk):
        match = match | (col == (idx[:, p:p + 1] + p * e))
    one_hot = match.astype(jnp.float32)

    # Gather-as-matmul on the MXU against the block-diagonal table: every
    # result lane is useful (lane-dense output block).
    out_ref[...] = jnp.dot(
        one_hot, table_ref[...], preferred_element_type=jnp.float32
    ).astype(out_ref.dtype)


@functools.partial(jax.jit, static_argnames=("tile_positions",))
def class_encoding_pallas(board, table, *, tile_positions=2048):
    """board: int array of any shape, table: (E, E) float32 orthogonal matrix."""
    e = table.shape[0]
    orig_shape = board.shape
    idx_flat = board.reshape(-1).astype(jnp.int32)
    n = idx_flat.shape[0]

    # Lane packing: PK consecutive positions share one 128-lane output row.
    pk = (128 // e) if (e <= 128 and 128 % e == 0) else 1
    lane = pk * e

    # Rows of the packed (rows, lane) output; keep everything 8-sublane aligned.
    tile_rows = max(8, _round_up(max(1, tile_positions // pk), 8))
    n_rows = -(-n // pk)
    n_rows_pad = _round_up(n_rows, 8)
    if n_rows_pad <= tile_rows:
        tile_rows = n_rows_pad
    else:
        n_rows_pad = _round_up(n_rows_pad, tile_rows)
    n_pad = n_rows_pad * pk

    if n_pad != n:
        idx_flat = jnp.pad(idx_flat, (0, n_pad - n))  # class 0 padding (valid)
    idx_2d = idx_flat.reshape(n_rows_pad, pk)

    # Block-diagonal 4-way replicated table (128x128 for E=32): resident in
    # VMEM across the whole grid (index_map always returns block (0, 0)).
    if pk > 1:
        table_big = jnp.kron(jnp.eye(pk, dtype=table.dtype), table)
    else:
        table_big = table

    grid = (n_rows_pad // tile_rows,)
    out = pl.pallas_call(
        _class_encoding_kernel,
        out_shape=jax.ShapeDtypeStruct((n_rows_pad, lane), jnp.float32),
        grid_spec=pltpu.PrefetchScalarGridSpec(
            num_scalar_prefetch=0,
            grid=grid,
            in_specs=[
                pl.BlockSpec((tile_rows, pk), lambda i: (i, 0)),     # indices
                pl.BlockSpec((lane, lane), lambda i: (0, 0)),        # table (resident)
            ],
            out_specs=pl.BlockSpec((tile_rows, lane), lambda i: (i, 0)),
        ),
        compiler_params=pltpu.CompilerParams(
            dimension_semantics=("parallel",),  # shards across v7x's 2 TCs
        ),
    )(idx_2d, table_big)

    # (rows, PK*E) row-major is bit-identical to (rows*PK, E): free reshape.
    out = out.reshape(n_pad, e)
    if n_pad != n:
        out = out[:n]  # only materializes a copy for non-aligned N
    return out.reshape(orig_shape + (e,))


def make_orthogonal_table(key, embedding_dim):
    """Deterministic stand-in for torch.randn -> SVD -> U @ Vh (orthogonal)."""
    gaussian = jax.random.normal(key, (embedding_dim, embedding_dim), jnp.float32)
    u, _, vh = jnp.linalg.svd(gaussian, full_matrices=False)
    return (u @ vh).astype(jnp.float32)


if __name__ == "__main__":
    embedding_dim = 32
    key = jax.random.PRNGKey(0)
    k_table, k_board = jax.random.split(key)

    # Frozen orthogonal embedding weights (built in-script, deterministic).
    table = make_orthogonal_table(k_table, embedding_dim)

    # "board" = game-state class ids, arbitrary shape; small example [2, 8, 8].
    board = jax.random.randint(k_board, (2, 8, 8), 0, embedding_dim, jnp.int32)
    assert int(board.max()) < embedding_dim

    out = jax.block_until_ready(class_encoding_pallas(board, table))

    # Reference: plain JAX embedding lookup.
    ref = table[board]
    assert out.shape == board.shape + (embedding_dim,)
    assert jnp.allclose(out, ref, atol=1e-5), "mismatch vs reference gather"

    # Orthogonality sanity check of the table itself.
    assert jnp.allclose(table @ table.T, jnp.eye(embedding_dim), atol=1e-4)

    print("KERNEL_OK")
</pallas_src>

<mosaic_0001>
module attributes {stable_mosaic.version = 11 : i64} {
  func.func @_class_encoding_kernel(%arg0: i32, %arg1: memref<32x4xi32, #tpu.memory_space<vmem>>, %arg2: memref<128x128xf32, #tpu.memory_space<vmem>>, %arg3: memref<32x128xf32, #tpu.memory_space<vmem>>) attributes {dimension_semantics = [#tpu.dimension_semantics<parallel>], iteration_bounds = array<i64: 1>, scalar_prefetch = 0 : i64, scratch_operands = 0 : i64, tpu.core_type = #tpu.core_type<tc>, window_params = [{transform_indices = @transform_0, window_bounds = array<i64: 32, 4>}, {pipeline_mode = #tpu.pipeline_mode<synchronous>, transform_indices = @transform_1, window_bounds = array<i64: 128, 128>}, {transform_indices = @transform_2, window_bounds = array<i64: 32, 128>}]} {
    %c0 = arith.constant 0 : index
    %c0_0 = arith.constant 0 : index
    %0 = vector.load %arg1[%c0, %c0_0] : memref<32x4xi32, #tpu.memory_space<vmem>>, vector<32x4xi32>
    %c0_i32 = arith.constant 0 : i32
    %1 = vector.broadcast %c0_i32 : i32 to vector<32x4xi32>
    %2 = arith.cmpi sge, %0, %1 : vector<32x4xi32>
    %c32_i32 = arith.constant 32 : i32
    %3 = vector.broadcast %c32_i32 : i32 to vector<32x4xi32>
    %4 = arith.cmpi slt, %0, %3 : vector<32x4xi32>
    %5 = arith.andi %2, %4 : vector<32x4xi1>
    %c128_i32 = arith.constant 128 : i32
    %6 = vector.broadcast %c128_i32 : i32 to vector<32x4xi32>
    %7 = arith.select %5, %0, %6 : vector<32x4xi1>, vector<32x4xi32>
    %8 = tpu.iota {dimensions = array<i32: 1>} : vector<32x128xi32>
    %9 = vector.extract_strided_slice %7 {offsets = [0, 0], sizes = [32, 1], strides = [1, 1]} : vector<32x4xi32> to vector<32x1xi32>
    %10 = vector.broadcast %9 : vector<32x1xi32> to vector<32x128xi32>
    %11 = arith.cmpi eq, %8, %10 : vector<32x128xi32>
    %12 = vector.extract_strided_slice %7 {offsets = [0, 1], sizes = [32, 1], strides = [1, 1]} : vector<32x4xi32> to vector<32x1xi32>
    %c32_i32_1 = arith.constant 32 : i32
    %13 = vector.broadcast %c32_i32_1 : i32 to vector<32x1xi32>
    %14 = arith.addi %12, %13 : vector<32x1xi32>
    %15 = vector.broadcast %14 : vector<32x1xi32> to vector<32x128xi32>
    %16 = arith.cmpi eq, %8, %15 : vector<32x128xi32>
    %17 = arith.ori %11, %16 : vector<32x128xi1>
    %18 = vector.extract_strided_slice %7 {offsets = [0, 2], sizes = [32, 1], strides = [1, 1]} : vector<32x4xi32> to vector<32x1xi32>
    %c64_i32 = arith.constant 64 : i32
    %19 = vector.broadcast %c64_i32 : i32 to vector<32x1xi32>
    %20 = arith.addi %18, %19 : vector<32x1xi32>
    %21 = vector.broadcast %20 : vector<32x1xi32> to vector<32x128xi32>
    %22 = arith.cmpi eq, %8, %21 : vector<32x128xi32>
    %23 = arith.ori %17, %22 : vector<32x128xi1>
    %24 = vector.extract_strided_slice %7 {offsets = [0, 3], sizes = [32, 1], strides = [1, 1]} : vector<32x4xi32> to vector<32x1xi32>
    %c96_i32 = arith.constant 96 : i32
    %25 = vector.broadcast %c96_i32 : i32 to vector<32x1xi32>
    %26 = arith.addi %24, %25 : vector<32x1xi32>
    %27 = vector.broadcast %26 : vector<32x1xi32> to vector<32x128xi32>
    %28 = arith.cmpi eq, %8, %27 : vector<32x128xi32>
    %29 = arith.ori %23, %28 : vector<32x128xi1>
    %30 = arith.extui %29 : vector<32x128xi1> to vector<32x128xi32>
    %31 = arith.sitofp %30 : vector<32x128xi32> to vector<32x128xf32>
    %c0_2 = arith.constant 0 : index
    %c0_3 = arith.constant 0 : index
    %32 = vector.load %arg2[%c0_2, %c0_3] : memref<128x128xf32, #tpu.memory_space<vmem>>, vector<128x128xf32>
    %cst = arith.constant dense<0.000000e+00> : vector<32x128xf32>
    %33 = tpu.matmul %31, %32, %cst {dimension_numbers = #tpu.dot_dimension_numbers<[1], [0], [0], [1], [0, 0, 1, 1], [], []>} : vector<32x128xf32>, vector<128x128xf32>, vector<32x128xf32> -> vector<32x128xf32>
    %c0_4 = arith.constant 0 : index
    %c0_5 = arith.constant 0 : index
    %34 = vector.load %arg3[%c0_4, %c0_5] : memref<32x128xf32, #tpu.memory_space<vmem>>, vector<32x128xf32>
    tpu.vector_store %arg3[%c0_4, %c0_5], %33 {strides = array<i32>} : memref<32x128xf32, #tpu.memory_space<vmem>>, vector<32x128xf32>,
    return
  }
  func.func @transform_0(%arg0: i32) -> (i32, i32) {
    %c0_i32 = arith.constant 0 : i32
    %c0_i32_0 = arith.constant 0 : i32
    return %arg0, %c0_i32 : i32, i32
  }
  func.func @transform_1(%arg0: i32) -> (i32, i32) {
    %c0_i32 = arith.constant 0 : i32
    %c0_i32_0 = arith.constant 0 : i32
    %c0_i32_1 = arith.constant 0 : i32
    return %c0_i32, %c0_i32_0 : i32, i32
  }
  func.func @transform_2(%arg0: i32) -> (i32, i32) {
    %c0_i32 = arith.constant 0 : i32
    %c0_i32_0 = arith.constant 0 : i32
    return %arg0, %c0_i32 : i32, i32
  }
}

</mosaic_0001>

<llo_original>
// kernel: class_encoding_pallas.1
$region0: #{class_encoding_pallas.1}
  #allocation0 [shape = 'u32[]', space=smem, size = 0x4, offset = 0x4, fixed_abs, tag = 'smem constant byte address 0x4 - core index']
  #allocation1 [shape = 'u32[72,128]{1,0:T(1,128)}', space=vmem, size = 0x9000, scoped, tag = 'internal scratch']
  %s0 = inlined_call_operand.vmem [shape: s32[32,4], index: 0, kind: input, shape index: {}]
  %s1 = inlined_call_operand.vmem [shape: f32[128,128], index: 1, kind: input, shape index: {}]
  %s2 = inlined_call_operand.vmem [shape: f32[32,128], index: 2, kind: output, shape index: {}]
  %s3 = sld [smem:[#allocation0]]
  $region18: #{class_encoding_pallas.1} parent=0
    _
  %s5 = ssub.s32 1, %s3
  %s6 = scalar_select 0, %s5, %s3
  // Predicated region
  $region2: #{class_encoding_pallas.1} parent=0 // pred_check
    _
  $region3: #{class_encoding_pallas.1} parent=0 // pred_check_branch
    %8 = sbr.rel (0) target = $region5
  $region4: #{class_encoding_pallas.1} parent=0 // pred_region
    _
  $region5: #{class_encoding_pallas.1} parent=0 // pred_fallthru
    _
  // Predicated region
  $region6: #{class_encoding_pallas.1} parent=0 // pred_check
    _
  $region7: #{class_encoding_pallas.1} parent=0 // pred_check_branch
    %10 = sbr.rel (0) target = $region9
  $region8: #{class_encoding_pallas.1} parent=0 // pred_region
    _
  $region9: #{class_encoding_pallas.1} parent=0 // pred_fallthru
    _
  %v11 = vld [vmem:[%s0] sm:$0xff]
  %v12 = vld [vmem:[%s0 + $0x8] sm:$0xff]
  %v13 = vld [vmem:[%s0 + $0x10] sm:$0xff]
  %v14 = vld [vmem:[%s0 + $0x18] sm:$0xff]
  %vm15 = vcmp.ge.s32.totalorder %v11, 0
  %vm16 = vcmp.ge.s32.totalorder %v12, 0
  %vm17 = vcmp.ge.s32.totalorder %v13, 0
  %vm18 = vcmp.ge.s32.totalorder %v14, 0
  %vm19 = vcmp.lt.s32.totalorder %v11, 32
  %vm20 = vcmp.lt.s32.totalorder %v12, 32
  %vm21 = vcmp.lt.s32.totalorder %v13, 32
  %vm22 = vcmp.lt.s32.totalorder %v14, 32
  %vm23 = vmand %vm15, %vm19
  %vm24 = vmand %vm16, %vm20
  %vm25 = vmand %vm17, %vm21
  %vm26 = vmand %vm18, %vm22
  %v27 = vsel %vm23, %v11, 128
  %v28 = vsel %vm24, %v12, 128
  %v29 = vsel %vm25, %v13, 128
  %v30 = vsel %vm26, %v14, 128
  %v31 = vlaneseq
  %v32 = vand.u32 %v31, 127
  %33 = vset.pattern.permute.xlu0 0
  %34 = vperm.xlu0 %33, %v27
  %v35 = vpop.permute.xlu0 %34
  %36 = vset.pattern.permute.xlu0 0
  %37 = vperm.xlu0 %36, %v28
  %v38 = vpop.permute.xlu0 %37
  %39 = vset.pattern.permute.xlu0 0
  %40 = vperm.xlu0 %39, %v29
  %v41 = vpop.permute.xlu0 %40
  %42 = vset.pattern.permute.xlu0 0
  %43 = vperm.xlu0 %42, %v30
  %v44 = vpop.permute.xlu0 %43
  %vm45 = vcmp.eq.s32.totalorder %v32, %v35
  %vm46 = vcmp.eq.s32.totalorder %v32, %v38
  %vm47 = vcmp.eq.s32.totalorder %v32, %v41
  %vm48 = vcmp.eq.s32.totalorder %v32, %v44
  %v49 = vadd.s32 %v27, 32
  %v50 = vadd.s32 %v28, 32
  %v51 = vadd.s32 %v29, 32
  %v52 = vadd.s32 %v30, 32
  %53 = vset.pattern.permute.xlu0 1
  %54 = vperm.xlu0 %53, %v49
  %v55 = vpop.permute.xlu0 %54
  %56 = vset.pattern.permute.xlu0 1
  %57 = vperm.xlu0 %56, %v50
  %v58 = vpop.permute.xlu0 %57
  %59 = vset.pattern.permute.xlu0 1
  %60 = vperm.xlu0 %59, %v51
  %v61 = vpop.permute.xlu0 %60
  %62 = vset.pattern.permute.xlu0 1
  %63 = vperm.xlu0 %62, %v52
  %v64 = vpop.permute.xlu0 %63
  %vm65 = vcmp.eq.s32.totalorder %v32, %v55
  %vm66 = vcmp.eq.s32.totalorder %v32, %v58
  %vm67 = vcmp.eq.s32.totalorder %v32, %v61
  %vm68 = vcmp.eq.s32.totalorder %v32, %v64
  %vm69 = vmor %vm45, %vm65
  %vm70 = vmor %vm46, %vm66
  %vm71 = vmor %vm47, %vm67
  %vm72 = vmor %vm48, %vm68
  %v73 = vadd.s32 %v27, 64
  %v74 = vadd.s32 %v28, 64
  %v75 = vadd.s32 %v29, 64
  %v76 = vadd.s32 %v30, 64
  %77 = vset.pattern.permute.xlu0 2
  %78 = vperm.xlu0 %77, %v73
  %v79 = vpop.permute.xlu0 %78
  %80 = vset.pattern.permute.xlu0 2
  %81 = vperm.xlu0 %80, %v74
  %v82 = vpop.permute.xlu0 %81
  %83 = vset.pattern.permute.xlu0 2
  %84 = vperm.xlu0 %83, %v75
  %v85 = vpop.permute.xlu0 %84
  %86 = vset.pattern.permute.xlu0 2
  %87 = vperm.xlu0 %86, %v76
  %v88 = vpop.permute.xlu0 %87
  %vm89 = vcmp.eq.s32.totalorder %v32, %v79
  %vm90 = vcmp.eq.s32.totalorder %v32, %v82
  %vm91 = vcmp.eq.s32.totalorder %v32, %v85
  %vm92 = vcmp.eq.s32.totalorder %v32, %v88
  %vm93 = vmor %vm69, %vm89
  %vm94 = vmor %vm70, %vm90
  %vm95 = vmor %vm71, %vm91
  %vm96 = vmor %vm72, %vm92
  %v97 = vadd.s32 %v27, 96
  %v98 = vadd.s32 %v28, 96
  %v99 = vadd.s32 %v29, 96
  %v100 = vadd.s32 %v30, 96
  %101 = vset.pattern.permute.xlu0 3
  %102 = vperm.xlu0 %101, %v97
  %v103 = vpop.permute.xlu0 %102
  %104 = vset.pattern.permute.xlu0 3
  %105 = vperm.xlu0 %104, %v98
  %v106 = vpop.permute.xlu0 %105
  %107 = vset.pattern.permute.xlu0 3
  %108 = vperm.xlu0 %107, %v99
  %v109 = vpop.permute.xlu0 %108
  %110 = vset.pattern.permute.xlu0 3
  %111 = vperm.xlu0 %110, %v100
  %v112 = vpop.permute.xlu0 %111
  %vm113 = vcmp.eq.s32.totalorder %v32, %v103
  %vm114 = vcmp.eq.s32.totalorder %v32, %v106
  %vm115 = vcmp.eq.s32.totalorder %v32, %v109
  %vm116 = vcmp.eq.s32.totalorder %v32, %v112
  %vm117 = vmor %vm93, %vm113
  %vm118 = vmor %vm94, %vm114
  %vm119 = vmor %vm95, %vm115
  %vm120 = vmor %vm96, %vm116
  %v121 = vsel %vm117, 1, 0
  %v122 = vsel %vm118, 1, 0
  %v123 = vsel %vm119, 1, 0
  %v124 = vsel %vm120, 1, 0
  %v125 = vcvt.s32.f32 %v121
  %v126 = vcvt.s32.f32 %v122
  %v127 = vcvt.s32.f32 %v123
  %v128 = vcvt.s32.f32 %v124
  %v129 = vld [vmem:[%s1] sm:$0xff]
  %v130 = vld [vmem:[%s1 + $0x8] sm:$0xff]
  %v131 = vld [vmem:[%s1 + $0x10] sm:$0xff]
  %v132 = vld [vmem:[%s1 + $0x18] sm:$0xff]
  %v133 = vld [vmem:[%s1 + $0x20] sm:$0xff]
  %v134 = vld [vmem:[%s1 + $0x28] sm:$0xff]
  %v135 = vld [vmem:[%s1 + $0x30] sm:$0xff]
  %v136 = vld [vmem:[%s1 + $0x38] sm:$0xff]
  %v137 = vld [vmem:[%s1 + $0x40] sm:$0xff]
  %v138 = vld [vmem:[%s1 + $0x48] sm:$0xff]
  %v139 = vld [vmem:[%s1 + $0x50] sm:$0xff]
  %v140 = vld [vmem:[%s1 + $0x58] sm:$0xff]
  %v141 = vld [vmem:[%s1 + $0x60] sm:$0xff]
  %v142 = vld [vmem:[%s1 + $0x68] sm:$0xff]
  %v143 = vld [vmem:[%s1 + $0x70] sm:$0xff]
  %v144 = vld [vmem:[%s1 + $0x78] sm:$0xff]
  %145 = vmatpush.msra.mxu0 %v144
  %146 = vmatpush.msra.mxu0 %v143
  %147 = vmatpush.msra.mxu0 %v142
  %148 = vmatpush.msra.mxu0 %v141
  %149 = vmatpush.msra.mxu0 %v140
  %150 = vmatpush.msra.mxu0 %v139
  %151 = vmatpush.msra.mxu0 %v138
  %152 = vmatpush.msra.mxu0 %v137
  %153 = vmatpush.msra.mxu0 %v136
  %154 = vmatpush.msra.mxu0 %v135
  %155 = vmatpush.msra.mxu0 %v134
  %156 = vmatpush.msra.mxu0 %v133
  %157 = vmatpush.msra.mxu0 %v132
  %158 = vmatpush.msra.mxu0 %v131
  %159 = vmatpush.msra.mxu0 %v130
  %160 = vmatpush.msra.mxu0 %v129
  %161 = vmatmul.f32.gmra.mxu0 %v125
  %v162 = vpop.f32.mrf.mxu0
  %v163 = vadd.f32 0.0, %v162
  %164 = vmatmul.f32.gmra.mxu0 %v126
  %v165 = vpop.f32.mrf.mxu0
  %v166 = vadd.f32 0.0, %v165
  %167 = vmatmul.f32.gmra.mxu0 %v127
  %v168 = vpop.f32.mrf.mxu0
  %v169 = vadd.f32 0.0, %v168
  %170 = vmatmul.f32.gmra.mxu0 %v128
  %v171 = vpop.f32.mrf.mxu0
  %v172 = vadd.f32 0.0, %v171
  %173 = vdwg.mxu0
  %174 = vst [vmem:[%s2] sm:$0xff] %v163
  %175 = vst [vmem:[%s2 + $0x8] sm:$0xff] %v166
  %176 = vst [vmem:[%s2 + $0x10] sm:$0xff] %v169
  %177 = vst [vmem:[%s2 + $0x18] sm:$0xff] %v172
  // Predicated region
  $region10: #{class_encoding_pallas.1} parent=0 // pred_check
    _
  $region11: #{class_encoding_pallas.1} parent=0 // pred_check_branch
    %179 = sbr.rel (0) target = $region13
  $region12: #{class_encoding_pallas.1} parent=0 // pred_region
    _
  $region13: #{class_encoding_pallas.1} parent=0 // pred_fallthru
    _
  // Predicated region
  $region14: #{class_encoding_pallas.1} parent=0 // pred_check
    _
  $region15: #{class_encoding_pallas.1} parent=0 // pred_check_branch
    %181 = sbr.rel (0) target = $region17
  $region16: #{class_encoding_pallas.1} parent=0 // pred_region
    _
  $region17: #{class_encoding_pallas.1} parent=0 // pred_fallthru
    _

</llo_original>
